<compile_context>
chip_gen: v6e
topology: v6e:2x2x1
jax: 0.10.0
libtpu: 0.0.40
codegen_flags: <defaults>
</compile_context>

<pallas_src>
import functools
import math

import jax
import jax.numpy as jnp
import numpy as np
from jax.experimental import pallas as pl
from jax.experimental.pallas import tpu as pltpu

H, W = 2, 2          # spatial size from x1 = torch.randn(1, 1, 2, 2)
C1 = 2               # conv2d / conv_transpose out channels
KH = KW = 3


def _fused_kernel(x_ref, w0_ref, b0_ref, wt_ref, b1_ref, out_ref, *, h, w):
    """conv2d(p=1) -> conv_transpose2d(p=1) -> channel softmax, fused, no scratch.

    x_ref  : (1, 1, h, w) f32 VMEM  -- raw NCHW input
    w0_ref : (C1*1*9,)    f32 SMEM  -- conv2d weight, flattened (O, I, kh, kw)
    b0_ref : (C1,)        f32 SMEM
    wt_ref : (C1*C1*9,)   f32 SMEM  -- conv_transpose weight, flattened (I, O, kh, kw)
    b1_ref : (C1,)        f32 SMEM
    out_ref: (1, C1, h, w) f32 VMEM
    """
    x = x_ref[0, 0]                                    # (h, w)

    # Hoisted zero borders (JAX does not CSE broadcasts -- build them once).
    zrow = jnp.zeros((1, w), jnp.float32)
    zcol = jnp.zeros((h + 2, 1), jnp.float32)

    def pad1(a):
        # 1-pixel zero padding, fully in registers (no VMEM scratch round-trip).
        a = jnp.concatenate([zrow, a, zrow], axis=0)           # (h+2, w)
        return jnp.concatenate([zcol, a, zcol], axis=1)        # (h+2, w+2)

    def windows(a_pad, center):
        # The 9 shifted (h, w) views of a 1-padded plane, computed ONCE per plane
        # and reused by every output channel (halves the XLU shift count).
        ws = [[a_pad[dy:dy + h, dx:dx + w] for dx in range(KW)] for dy in range(KH)]
        ws[1][1] = center                                       # center view == plane
        return ws

    # ---- Conv2d(1 -> C1, k=3, s=1, p=1) ----
    xw = windows(pad1(x), x)
    v1 = []
    for o in range(C1):
        acc = jnp.full((h, w), b0_ref[o], dtype=jnp.float32)
        for dy in range(KH):
            for dx in range(KW):
                acc = acc + w0_ref[o * KH * KW + dy * KW + dx] * xw[dy][dx]
        v1.append(acc)

    # ---- ConvTranspose2d(C1 -> C1, k=3, s=1, p=1) ----
    # == 'same' correlation over the 1-padded v1 with the kernel spatially flipped and
    # (in, out) channels swapped.  Weight layout is (in=c, out=o, kh, kw), flattened.
    v1w = [windows(pad1(v1[c]), v1[c]) for c in range(C1)]
    v2 = []
    for o in range(C1):
        acc = jnp.full((h, w), b1_ref[o], dtype=jnp.float32)
        for c in range(C1):
            for dy in range(KH):
                for dx in range(KW):
                    wgt = wt_ref[(c * C1 + o) * KH * KW
                                 + (KH - 1 - dy) * KW + (KW - 1 - dx)]
                    acc = acc + wgt * v1w[c][dy][dx]
        v2.append(acc)

    # ---- Softmax over the 2 channels == logistic of the channel difference ----
    d = v2[0] - v2[1]
    p0 = pl.reciprocal(1.0 + jnp.exp(-d), approx=True)   # exp + recip both on the EUP
    p1 = 1.0 - p0
    out_ref[0, 0] = p0                                    # direct per-channel stores,
    out_ref[0, 1] = p1                                    # no sublane interleave/concat


@jax.jit
def model_forward(x, w0, b0, wt, b1):
    """x: (1, 1, H, W) NCHW float32 -> (1, C1, H, W) float32."""
    n, cin, h, w = x.shape
    assert (n, cin) == (1, 1)

    return pl.pallas_call(
        functools.partial(_fused_kernel, h=h, w=w),
        out_shape=jax.ShapeDtypeStruct((1, C1, h, w), jnp.float32),
        in_specs=[
            pl.BlockSpec(memory_space=pltpu.MemorySpace.VMEM),   # x, whole array
            pl.BlockSpec(memory_space=pltpu.MemorySpace.SMEM),   # w0 flat
            pl.BlockSpec(memory_space=pltpu.MemorySpace.SMEM),   # b0
            pl.BlockSpec(memory_space=pltpu.MemorySpace.SMEM),   # wt flat
            pl.BlockSpec(memory_space=pltpu.MemorySpace.SMEM),   # b1
        ],
        out_specs=pl.BlockSpec(memory_space=pltpu.MemorySpace.VMEM),
        cost_estimate=pl.CostEstimate(flops=500, transcendentals=4,
                                      bytes_accessed=280),
    )(
        x.astype(jnp.float32),
        w0.reshape(-1).astype(jnp.float32),   # reshape is layout-only, no extra fusion
        b0.astype(jnp.float32),
        wt.reshape(-1).astype(jnp.float32),
        b1.astype(jnp.float32),
    )


def reference(x, w0, b0, wt, b1):
    """Pure-JAX reference using XLA convolutions."""
    v1 = jax.lax.conv_general_dilated(
        x, w0, window_strides=(1, 1), padding=((1, 1), (1, 1)),
        dimension_numbers=("NCHW", "OIHW", "NCHW")) + b0[None, :, None, None]
    # ConvTranspose(s=1, p=1, k=3) == same-conv with flipped, channel-swapped kernel.
    k = jnp.flip(jnp.transpose(wt, (1, 0, 2, 3)), axis=(2, 3))  # (Cout, Cin, 3, 3)
    v2 = jax.lax.conv_general_dilated(
        v1, k, window_strides=(1, 1), padding=((1, 1), (1, 1)),
        dimension_numbers=("NCHW", "OIHW", "NCHW")) + b1[None, :, None, None]
    return jax.nn.softmax(v2, axis=1)


if __name__ == "__main__":
    key = jax.random.PRNGKey(0)
    k1, k2, k3, k4, k5 = jax.random.split(key, 5)

    x = jax.random.normal(k1, (1, 1, H, W), jnp.float32)

    # Deterministic parameter init (PyTorch-style uniform bounds).
    bound0 = 1.0 / math.sqrt(1 * KH * KW)
    w0 = jax.random.uniform(k2, (C1, 1, KH, KW), jnp.float32, -bound0, bound0)
    b0 = jax.random.uniform(k3, (C1,), jnp.float32, -bound0, bound0)
    bound1 = 1.0 / math.sqrt(C1 * KH * KW)
    wt = jax.random.uniform(k4, (C1, C1, KH, KW), jnp.float32, -bound1, bound1)
    b1 = jax.random.uniform(k5, (C1,), jnp.float32, -bound1, bound1)

    out = jax.block_until_ready(model_forward(x, w0, b0, wt, b1))
    ref = jax.block_until_ready(reference(x, w0, b0, wt, b1))

    # Tolerance covers the EUP approximate reciprocal (~1e-4 relative error) used for
    # the softmax denominator; any conv/weight-indexing bug would be O(0.1-1) off.
    np.testing.assert_allclose(np.asarray(out), np.asarray(ref), rtol=5e-3, atol=5e-3)
    assert out.shape == (1, C1, H, W)
    print("KERNEL_OK")
</pallas_src>

<mosaic_0001>
module attributes {stable_mosaic.version = 11 : i64} {
  func.func @_fused_kernel(%arg0: memref<1x1x2x2xf32, #tpu.memory_space<vmem>>, %arg1: memref<18xf32, #tpu.memory_space<smem>>, %arg2: memref<2xf32, #tpu.memory_space<smem>>, %arg3: memref<36xf32, #tpu.memory_space<smem>>, %arg4: memref<2xf32, #tpu.memory_space<smem>>, %arg5: memref<1x2x2x2xf32, #tpu.memory_space<vmem>>) attributes {dimension_semantics = [], scalar_prefetch = 0 : i64, scratch_operands = 0 : i64, tpu.core_type = #tpu.core_type<tc>} {
    %c0 = arith.constant 0 : index
    %c0_0 = arith.constant 0 : index
    %c0_1 = arith.constant 0 : index
    %c0_2 = arith.constant 0 : index
    %0 = vector.load %arg0[%c0, %c0_0, %c0_1, %c0_2] : memref<1x1x2x2xf32, #tpu.memory_space<vmem>>, vector<1x1x2x2xf32>
    %1 = vector.shape_cast %0 : vector<1x1x2x2xf32> to vector<2x2xf32>
    %cst = arith.constant 0.000000e+00 : f32
    %2 = vector.broadcast %cst : f32 to vector<1x2xf32>
    %cst_3 = arith.constant 0.000000e+00 : f32
    %3 = vector.broadcast %cst_3 : f32 to vector<4x1xf32>
    %4 = tpu.concatenate %2, %1, %2 in 0 : vector<1x2xf32>, vector<2x2xf32>, vector<1x2xf32> -> vector<4x2xf32>
    %5 = tpu.concatenate %3, %4, %3 in 1 : vector<4x1xf32>, vector<4x2xf32>, vector<4x1xf32> -> vector<4x4xf32>
    %6 = vector.extract_strided_slice %5 {offsets = [0, 0], sizes = [2, 2], strides = [1, 1]} : vector<4x4xf32> to vector<2x2xf32>
    %7 = vector.extract_strided_slice %5 {offsets = [0, 1], sizes = [2, 2], strides = [1, 1]} : vector<4x4xf32> to vector<2x2xf32>
    %8 = vector.extract_strided_slice %5 {offsets = [0, 2], sizes = [2, 2], strides = [1, 1]} : vector<4x4xf32> to vector<2x2xf32>
    %9 = vector.extract_strided_slice %5 {offsets = [1, 0], sizes = [2, 2], strides = [1, 1]} : vector<4x4xf32> to vector<2x2xf32>
    %10 = vector.extract_strided_slice %5 {offsets = [1, 2], sizes = [2, 2], strides = [1, 1]} : vector<4x4xf32> to vector<2x2xf32>
    %11 = vector.extract_strided_slice %5 {offsets = [2, 0], sizes = [2, 2], strides = [1, 1]} : vector<4x4xf32> to vector<2x2xf32>
    %12 = vector.extract_strided_slice %5 {offsets = [2, 1], sizes = [2, 2], strides = [1, 1]} : vector<4x4xf32> to vector<2x2xf32>
    %13 = vector.extract_strided_slice %5 {offsets = [2, 2], sizes = [2, 2], strides = [1, 1]} : vector<4x4xf32> to vector<2x2xf32>
    %c0_4 = arith.constant 0 : index
    %14 = memref.load %arg2[%c0_4] : memref<2xf32, #tpu.memory_space<smem>>
    %15 = vector.broadcast %14 : f32 to vector<2x2xf32>
    %c0_5 = arith.constant 0 : index
    %16 = memref.load %arg1[%c0_5] : memref<18xf32, #tpu.memory_space<smem>>
    %17 = vector.broadcast %16 : f32 to vector<2x2xf32>
    %18 = arith.mulf %17, %6 : vector<2x2xf32>
    %19 = arith.addf %15, %18 : vector<2x2xf32>
    %c1 = arith.constant 1 : index
    %20 = memref.load %arg1[%c1] : memref<18xf32, #tpu.memory_space<smem>>
    %21 = vector.broadcast %20 : f32 to vector<2x2xf32>
    %22 = arith.mulf %21, %7 : vector<2x2xf32>
    %23 = arith.addf %19, %22 : vector<2x2xf32>
    %c2 = arith.constant 2 : index
    %24 = memref.load %arg1[%c2] : memref<18xf32, #tpu.memory_space<smem>>
    %25 = vector.broadcast %24 : f32 to vector<2x2xf32>
    %26 = arith.mulf %25, %8 : vector<2x2xf32>
    %27 = arith.addf %23, %26 : vector<2x2xf32>
    %c3 = arith.constant 3 : index
    %28 = memref.load %arg1[%c3] : memref<18xf32, #tpu.memory_space<smem>>
    %29 = vector.broadcast %28 : f32 to vector<2x2xf32>
    %30 = arith.mulf %29, %9 : vector<2x2xf32>
    %31 = arith.addf %27, %30 : vector<2x2xf32>
    %c4 = arith.constant 4 : index
    %32 = memref.load %arg1[%c4] : memref<18xf32, #tpu.memory_space<smem>>
    %33 = vector.broadcast %32 : f32 to vector<2x2xf32>
    %34 = arith.mulf %33, %1 : vector<2x2xf32>
    %35 = arith.addf %31, %34 : vector<2x2xf32>
    %c5 = arith.constant 5 : index
    %36 = memref.load %arg1[%c5] : memref<18xf32, #tpu.memory_space<smem>>
    %37 = vector.broadcast %36 : f32 to vector<2x2xf32>
    %38 = arith.mulf %37, %10 : vector<2x2xf32>
    %39 = arith.addf %35, %38 : vector<2x2xf32>
    %c6 = arith.constant 6 : index
    %40 = memref.load %arg1[%c6] : memref<18xf32, #tpu.memory_space<smem>>
    %41 = vector.broadcast %40 : f32 to vector<2x2xf32>
    %42 = arith.mulf %41, %11 : vector<2x2xf32>
    %43 = arith.addf %39, %42 : vector<2x2xf32>
    %c7 = arith.constant 7 : index
    %44 = memref.load %arg1[%c7] : memref<18xf32, #tpu.memory_space<smem>>
    %45 = vector.broadcast %44 : f32 to vector<2x2xf32>
    %46 = arith.mulf %45, %12 : vector<2x2xf32>
    %47 = arith.addf %43, %46 : vector<2x2xf32>
    %c8 = arith.constant 8 : index
    %48 = memref.load %arg1[%c8] : memref<18xf32, #tpu.memory_space<smem>>
    %49 = vector.broadcast %48 : f32 to vector<2x2xf32>
    %50 = arith.mulf %49, %13 : vector<2x2xf32>
    %51 = arith.addf %47, %50 : vector<2x2xf32>
    %c1_6 = arith.constant 1 : index
    %52 = memref.load %arg2[%c1_6] : memref<2xf32, #tpu.memory_space<smem>>
    %53 = vector.broadcast %52 : f32 to vector<2x2xf32>
    %c9 = arith.constant 9 : index
    %54 = memref.load %arg1[%c9] : memref<18xf32, #tpu.memory_space<smem>>
    %55 = vector.broadcast %54 : f32 to vector<2x2xf32>
    %56 = arith.mulf %55, %6 : vector<2x2xf32>
    %57 = arith.addf %53, %56 : vector<2x2xf32>
    %c10 = arith.constant 10 : index
    %58 = memref.load %arg1[%c10] : memref<18xf32, #tpu.memory_space<smem>>
    %59 = vector.broadcast %58 : f32 to vector<2x2xf32>
    %60 = arith.mulf %59, %7 : vector<2x2xf32>
    %61 = arith.addf %57, %60 : vector<2x2xf32>
    %c11 = arith.constant 11 : index
    %62 = memref.load %arg1[%c11] : memref<18xf32, #tpu.memory_space<smem>>
    %63 = vector.broadcast %62 : f32 to vector<2x2xf32>
    %64 = arith.mulf %63, %8 : vector<2x2xf32>
    %65 = arith.addf %61, %64 : vector<2x2xf32>
    %c12 = arith.constant 12 : index
    %66 = memref.load %arg1[%c12] : memref<18xf32, #tpu.memory_space<smem>>
    %67 = vector.broadcast %66 : f32 to vector<2x2xf32>
    %68 = arith.mulf %67, %9 : vector<2x2xf32>
    %69 = arith.addf %65, %68 : vector<2x2xf32>
    %c13 = arith.constant 13 : index
    %70 = memref.load %arg1[%c13] : memref<18xf32, #tpu.memory_space<smem>>
    %71 = vector.broadcast %70 : f32 to vector<2x2xf32>
    %72 = arith.mulf %71, %1 : vector<2x2xf32>
    %73 = arith.addf %69, %72 : vector<2x2xf32>
    %c14 = arith.constant 14 : index
    %74 = memref.load %arg1[%c14] : memref<18xf32, #tpu.memory_space<smem>>
    %75 = vector.broadcast %74 : f32 to vector<2x2xf32>
    %76 = arith.mulf %75, %10 : vector<2x2xf32>
    %77 = arith.addf %73, %76 : vector<2x2xf32>
    %c15 = arith.constant 15 : index
    %78 = memref.load %arg1[%c15] : memref<18xf32, #tpu.memory_space<smem>>
    %79 = vector.broadcast %78 : f32 to vector<2x2xf32>
    %80 = arith.mulf %79, %11 : vector<2x2xf32>
    %81 = arith.addf %77, %80 : vector<2x2xf32>
    %c16 = arith.constant 16 : index
    %82 = memref.load %arg1[%c16] : memref<18xf32, #tpu.memory_space<smem>>
    %83 = vector.broadcast %82 : f32 to vector<2x2xf32>
    %84 = arith.mulf %83, %12 : vector<2x2xf32>
    %85 = arith.addf %81, %84 : vector<2x2xf32>
    %c17 = arith.constant 17 : index
    %86 = memref.load %arg1[%c17] : memref<18xf32, #tpu.memory_space<smem>>
    %87 = vector.broadcast %86 : f32 to vector<2x2xf32>
    %88 = arith.mulf %87, %13 : vector<2x2xf32>
    %89 = arith.addf %85, %88 : vector<2x2xf32>
    %90 = tpu.concatenate %2, %51, %2 in 0 : vector<1x2xf32>, vector<2x2xf32>, vector<1x2xf32> -> vector<4x2xf32>
    %91 = tpu.concatenate %3, %90, %3 in 1 : vector<4x1xf32>, vector<4x2xf32>, vector<4x1xf32> -> vector<4x4xf32>
    %92 = vector.extract_strided_slice %91 {offsets = [0, 0], sizes = [2, 2], strides = [1, 1]} : vector<4x4xf32> to vector<2x2xf32>
    %93 = vector.extract_strided_slice %91 {offsets = [0, 1], sizes = [2, 2], strides = [1, 1]} : vector<4x4xf32> to vector<2x2xf32>
    %94 = vector.extract_strided_slice %91 {offsets = [0, 2], sizes = [2, 2], strides = [1, 1]} : vector<4x4xf32> to vector<2x2xf32>
    %95 = vector.extract_strided_slice %91 {offsets = [1, 0], sizes = [2, 2], strides = [1, 1]} : vector<4x4xf32> to vector<2x2xf32>
    %96 = vector.extract_strided_slice %91 {offsets = [1, 2], sizes = [2, 2], strides = [1, 1]} : vector<4x4xf32> to vector<2x2xf32>
    %97 = vector.extract_strided_slice %91 {offsets = [2, 0], sizes = [2, 2], strides = [1, 1]} : vector<4x4xf32> to vector<2x2xf32>
    %98 = vector.extract_strided_slice %91 {offsets = [2, 1], sizes = [2, 2], strides = [1, 1]} : vector<4x4xf32> to vector<2x2xf32>
    %99 = vector.extract_strided_slice %91 {offsets = [2, 2], sizes = [2, 2], strides = [1, 1]} : vector<4x4xf32> to vector<2x2xf32>
    %100 = tpu.concatenate %2, %89, %2 in 0 : vector<1x2xf32>, vector<2x2xf32>, vector<1x2xf32> -> vector<4x2xf32>
    %101 = tpu.concatenate %3, %100, %3 in 1 : vector<4x1xf32>, vector<4x2xf32>, vector<4x1xf32> -> vector<4x4xf32>
    %102 = vector.extract_strided_slice %101 {offsets = [0, 0], sizes = [2, 2], strides = [1, 1]} : vector<4x4xf32> to vector<2x2xf32>
    %103 = vector.extract_strided_slice %101 {offsets = [0, 1], sizes = [2, 2], strides = [1, 1]} : vector<4x4xf32> to vector<2x2xf32>
    %104 = vector.extract_strided_slice %101 {offsets = [0, 2], sizes = [2, 2], strides = [1, 1]} : vector<4x4xf32> to vector<2x2xf32>
    %105 = vector.extract_strided_slice %101 {offsets = [1, 0], sizes = [2, 2], strides = [1, 1]} : vector<4x4xf32> to vector<2x2xf32>
    %106 = vector.extract_strided_slice %101 {offsets = [1, 2], sizes = [2, 2], strides = [1, 1]} : vector<4x4xf32> to vector<2x2xf32>
    %107 = vector.extract_strided_slice %101 {offsets = [2, 0], sizes = [2, 2], strides = [1, 1]} : vector<4x4xf32> to vector<2x2xf32>
    %108 = vector.extract_strided_slice %101 {offsets = [2, 1], sizes = [2, 2], strides = [1, 1]} : vector<4x4xf32> to vector<2x2xf32>
    %109 = vector.extract_strided_slice %101 {offsets = [2, 2], sizes = [2, 2], strides = [1, 1]} : vector<4x4xf32> to vector<2x2xf32>
    %c0_7 = arith.constant 0 : index
    %110 = memref.load %arg4[%c0_7] : memref<2xf32, #tpu.memory_space<smem>>
    %111 = vector.broadcast %110 : f32 to vector<2x2xf32>
    %c8_8 = arith.constant 8 : index
    %112 = memref.load %arg3[%c8_8] : memref<36xf32, #tpu.memory_space<smem>>
    %113 = vector.broadcast %112 : f32 to vector<2x2xf32>
    %114 = arith.mulf %113, %92 : vector<2x2xf32>
    %115 = arith.addf %111, %114 : vector<2x2xf32>
    %c7_9 = arith.constant 7 : index
    %116 = memref.load %arg3[%c7_9] : memref<36xf32, #tpu.memory_space<smem>>
    %117 = vector.broadcast %116 : f32 to vector<2x2xf32>
    %118 = arith.mulf %117, %93 : vector<2x2xf32>
    %119 = arith.addf %115, %118 : vector<2x2xf32>
    %c6_10 = arith.constant 6 : index
    %120 = memref.load %arg3[%c6_10] : memref<36xf32, #tpu.memory_space<smem>>
    %121 = vector.broadcast %120 : f32 to vector<2x2xf32>
    %122 = arith.mulf %121, %94 : vector<2x2xf32>
    %123 = arith.addf %119, %122 : vector<2x2xf32>
    %c5_11 = arith.constant 5 : index
    %124 = memref.load %arg3[%c5_11] : memref<36xf32, #tpu.memory_space<smem>>
    %125 = vector.broadcast %124 : f32 to vector<2x2xf32>
    %126 = arith.mulf %125, %95 : vector<2x2xf32>
    %127 = arith.addf %123, %126 : vector<2x2xf32>
    %c4_12 = arith.constant 4 : index
    %128 = memref.load %arg3[%c4_12] : memref<36xf32, #tpu.memory_space<smem>>
    %129 = vector.broadcast %128 : f32 to vector<2x2xf32>
    %130 = arith.mulf %129, %51 : vector<2x2xf32>
    %131 = arith.addf %127, %130 : vector<2x2xf32>
    %c3_13 = arith.constant 3 : index
    %132 = memref.load %arg3[%c3_13] : memref<36xf32, #tpu.memory_space<smem>>
    %133 = vector.broadcast %132 : f32 to vector<2x2xf32>
    %134 = arith.mulf %133, %96 : vector<2x2xf32>
    %135 = arith.addf %131, %134 : vector<2x2xf32>
    %c2_14 = arith.constant 2 : index
    %136 = memref.load %arg3[%c2_14] : memref<36xf32, #tpu.memory_space<smem>>
    %137 = vector.broadcast %136 : f32 to vector<2x2xf32>
    %138 = arith.mulf %137, %97 : vector<2x2xf32>
    %139 = arith.addf %135, %138 : vector<2x2xf32>
    %c1_15 = arith.constant 1 : index
    %140 = memref.load %arg3[%c1_15] : memref<36xf32, #tpu.memory_space<smem>>
    %141 = vector.broadcast %140 : f32 to vector<2x2xf32>
    %142 = arith.mulf %141, %98 : vector<2x2xf32>
    %143 = arith.addf %139, %142 : vector<2x2xf32>
    %c0_16 = arith.constant 0 : index
    %144 = memref.load %arg3[%c0_16] : memref<36xf32, #tpu.memory_space<smem>>
    %145 = vector.broadcast %144 : f32 to vector<2x2xf32>
    %146 = arith.mulf %145, %99 : vector<2x2xf32>
    %147 = arith.addf %143, %146 : vector<2x2xf32>
    %c26 = arith.constant 26 : index
    %148 = memref.load %arg3[%c26] : memref<36xf32, #tpu.memory_space<smem>>
    %149 = vector.broadcast %148 : f32 to vector<2x2xf32>
    %150 = arith.mulf %149, %102 : vector<2x2xf32>
    %151 = arith.addf %147, %150 : vector<2x2xf32>
    %c25 = arith.constant 25 : index
    %152 = memref.load %arg3[%c25] : memref<36xf32, #tpu.memory_space<smem>>
    %153 = vector.broadcast %152 : f32 to vector<2x2xf32>
    %154 = arith.mulf %153, %103 : vector<2x2xf32>
    %155 = arith.addf %151, %154 : vector<2x2xf32>
    %c24 = arith.constant 24 : index
    %156 = memref.load %arg3[%c24] : memref<36xf32, #tpu.memory_space<smem>>
    %157 = vector.broadcast %156 : f32 to vector<2x2xf32>
    %158 = arith.mulf %157, %104 : vector<2x2xf32>
    %159 = arith.addf %155, %158 : vector<2x2xf32>
    %c23 = arith.constant 23 : index
    %160 = memref.load %arg3[%c23] : memref<36xf32, #tpu.memory_space<smem>>
    %161 = vector.broadcast %160 : f32 to vector<2x2xf32>
    %162 = arith.mulf %161, %105 : vector<2x2xf32>
    %163 = arith.addf %159, %162 : vector<2x2xf32>
    %c22 = arith.constant 22 : index
    %164 = memref.load %arg3[%c22] : memref<36xf32, #tpu.memory_space<smem>>
    %165 = vector.broadcast %164 : f32 to vector<2x2xf32>
    %166 = arith.mulf %165, %89 : vector<2x2xf32>
    %167 = arith.addf %163, %166 : vector<2x2xf32>
    %c21 = arith.constant 21 : index
    %168 = memref.load %arg3[%c21] : memref<36xf32, #tpu.memory_space<smem>>
    %169 = vector.broadcast %168 : f32 to vector<2x2xf32>
    %170 = arith.mulf %169, %106 : vector<2x2xf32>
    %171 = arith.addf %167, %170 : vector<2x2xf32>
    %c20 = arith.constant 20 : index
    %172 = memref.load %arg3[%c20] : memref<36xf32, #tpu.memory_space<smem>>
    %173 = vector.broadcast %172 : f32 to vector<2x2xf32>
    %174 = arith.mulf %173, %107 : vector<2x2xf32>
    %175 = arith.addf %171, %174 : vector<2x2xf32>
    %c19 = arith.constant 19 : index
    %176 = memref.load %arg3[%c19] : memref<36xf32, #tpu.memory_space<smem>>
    %177 = vector.broadcast %176 : f32 to vector<2x2xf32>
    %178 = arith.mulf %177, %108 : vector<2x2xf32>
    %179 = arith.addf %175, %178 : vector<2x2xf32>
    %c18 = arith.constant 18 : index
    %180 = memref.load %arg3[%c18] : memref<36xf32, #tpu.memory_space<smem>>
    %181 = vector.broadcast %180 : f32 to vector<2x2xf32>
    %182 = arith.mulf %181, %109 : vector<2x2xf32>
    %183 = arith.addf %179, %182 : vector<2x2xf32>
    %c1_17 = arith.constant 1 : index
    %184 = memref.load %arg4[%c1_17] : memref<2xf32, #tpu.memory_space<smem>>
    %185 = vector.broadcast %184 : f32 to vector<2x2xf32>
    %c17_18 = arith.constant 17 : index
    %186 = memref.load %arg3[%c17_18] : memref<36xf32, #tpu.memory_space<smem>>
    %187 = vector.broadcast %186 : f32 to vector<2x2xf32>
    %188 = arith.mulf %187, %92 : vector<2x2xf32>
    %189 = arith.addf %185, %188 : vector<2x2xf32>
    %c16_19 = arith.constant 16 : index
    %190 = memref.load %arg3[%c16_19] : memref<36xf32, #tpu.memory_space<smem>>
    %191 = vector.broadcast %190 : f32 to vector<2x2xf32>
    %192 = arith.mulf %191, %93 : vector<2x2xf32>
    %193 = arith.addf %189, %192 : vector<2x2xf32>
    %c15_20 = arith.constant 15 : index
    %194 = memref.load %arg3[%c15_20] : memref<36xf32, #tpu.memory_space<smem>>
    %195 = vector.broadcast %194 : f32 to vector<2x2xf32>
    %196 = arith.mulf %195, %94 : vector<2x2xf32>
    %197 = arith.addf %193, %196 : vector<2x2xf32>
    %c14_21 = arith.constant 14 : index
    %198 = memref.load %arg3[%c14_21] : memref<36xf32, #tpu.memory_space<smem>>
    %199 = vector.broadcast %198 : f32 to vector<2x2xf32>
    %200 = arith.mulf %199, %95 : vector<2x2xf32>
    %201 = arith.addf %197, %200 : vector<2x2xf32>
    %c13_22 = arith.constant 13 : index
    %202 = memref.load %arg3[%c13_22] : memref<36xf32, #tpu.memory_space<smem>>
    %203 = vector.broadcast %202 : f32 to vector<2x2xf32>
    %204 = arith.mulf %203, %51 : vector<2x2xf32>
    %205 = arith.addf %201, %204 : vector<2x2xf32>
    %c12_23 = arith.constant 12 : index
    %206 = memref.load %arg3[%c12_23] : memref<36xf32, #tpu.memory_space<smem>>
    %207 = vector.broadcast %206 : f32 to vector<2x2xf32>
    %208 = arith.mulf %207, %96 : vector<2x2xf32>
    %209 = arith.addf %205, %208 : vector<2x2xf32>
    %c11_24 = arith.constant 11 : index
    %210 = memref.load %arg3[%c11_24] : memref<36xf32, #tpu.memory_space<smem>>
    %211 = vector.broadcast %210 : f32 to vector<2x2xf32>
    %212 = arith.mulf %211, %97 : vector<2x2xf32>
    %213 = arith.addf %209, %212 : vector<2x2xf32>
    %c10_25 = arith.constant 10 : index
    %214 = memref.load %arg3[%c10_25] : memref<36xf32, #tpu.memory_space<smem>>
    %215 = vector.broadcast %214 : f32 to vector<2x2xf32>
    %216 = arith.mulf %215, %98 : vector<2x2xf32>
    %217 = arith.addf %213, %216 : vector<2x2xf32>
    %c9_26 = arith.constant 9 : index
    %218 = memref.load %arg3[%c9_26] : memref<36xf32, #tpu.memory_space<smem>>
    %219 = vector.broadcast %218 : f32 to vector<2x2xf32>
    %220 = arith.mulf %219, %99 : vector<2x2xf32>
    %221 = arith.addf %217, %220 : vector<2x2xf32>
    %c35 = arith.constant 35 : index
    %222 = memref.load %arg3[%c35] : memref<36xf32, #tpu.memory_space<smem>>
    %223 = vector.broadcast %222 : f32 to vector<2x2xf32>
    %224 = arith.mulf %223, %102 : vector<2x2xf32>
    %225 = arith.addf %221, %224 : vector<2x2xf32>
    %c34 = arith.constant 34 : index
    %226 = memref.load %arg3[%c34] : memref<36xf32, #tpu.memory_space<smem>>
    %227 = vector.broadcast %226 : f32 to vector<2x2xf32>
    %228 = arith.mulf %227, %103 : vector<2x2xf32>
    %229 = arith.addf %225, %228 : vector<2x2xf32>
    %c33 = arith.constant 33 : index
    %230 = memref.load %arg3[%c33] : memref<36xf32, #tpu.memory_space<smem>>
    %231 = vector.broadcast %230 : f32 to vector<2x2xf32>
    %232 = arith.mulf %231, %104 : vector<2x2xf32>
    %233 = arith.addf %229, %232 : vector<2x2xf32>
    %c32 = arith.constant 32 : index
    %234 = memref.load %arg3[%c32] : memref<36xf32, #tpu.memory_space<smem>>
    %235 = vector.broadcast %234 : f32 to vector<2x2xf32>
    %236 = arith.mulf %235, %105 : vector<2x2xf32>
    %237 = arith.addf %233, %236 : vector<2x2xf32>
    %c31 = arith.constant 31 : index
    %238 = memref.load %arg3[%c31] : memref<36xf32, #tpu.memory_space<smem>>
    %239 = vector.broadcast %238 : f32 to vector<2x2xf32>
    %240 = arith.mulf %239, %89 : vector<2x2xf32>
    %241 = arith.addf %237, %240 : vector<2x2xf32>
    %c30 = arith.constant 30 : index
    %242 = memref.load %arg3[%c30] : memref<36xf32, #tpu.memory_space<smem>>
    %243 = vector.broadcast %242 : f32 to vector<2x2xf32>
    %244 = arith.mulf %243, %106 : vector<2x2xf32>
    %245 = arith.addf %241, %244 : vector<2x2xf32>
    %c29 = arith.constant 29 : index
    %246 = memref.load %arg3[%c29] : memref<36xf32, #tpu.memory_space<smem>>
    %247 = vector.broadcast %246 : f32 to vector<2x2xf32>
    %248 = arith.mulf %247, %107 : vector<2x2xf32>
    %249 = arith.addf %245, %248 : vector<2x2xf32>
    %c28 = arith.constant 28 : index
    %250 = memref.load %arg3[%c28] : memref<36xf32, #tpu.memory_space<smem>>
    %251 = vector.broadcast %250 : f32 to vector<2x2xf32>
    %252 = arith.mulf %251, %108 : vector<2x2xf32>
    %253 = arith.addf %249, %252 : vector<2x2xf32>
    %c27 = arith.constant 27 : index
    %254 = memref.load %arg3[%c27] : memref<36xf32, #tpu.memory_space<smem>>
    %255 = vector.broadcast %254 : f32 to vector<2x2xf32>
    %256 = arith.mulf %255, %109 : vector<2x2xf32>
    %257 = arith.addf %253, %256 : vector<2x2xf32>
    %258 = arith.subf %183, %257 : vector<2x2xf32>
    %cst_27 = arith.constant 0.000000e+00 : f32
    %259 = vector.broadcast %cst_27 : f32 to vector<2x2xf32>
    %260 = arith.subf %259, %258 : vector<2x2xf32>
    %261 = math.exp %260 : vector<2x2xf32>
    %cst_28 = arith.constant 1.000000e+00 : f32
    %262 = vector.broadcast %cst_28 : f32 to vector<2x2xf32>
    %263 = arith.addf %262, %261 : vector<2x2xf32>
    %264 = tpu.reciprocal %263 {approx = true} : vector<2x2xf32> -> vector<2x2xf32>
    %cst_29 = arith.constant 1.000000e+00 : f32
    %265 = vector.broadcast %cst_29 : f32 to vector<2x2xf32>
    %266 = arith.subf %265, %264 : vector<2x2xf32>
    %c0_30 = arith.constant 0 : index
    %c0_31 = arith.constant 0 : index
    %c0_32 = arith.constant 0 : index
    %c0_33 = arith.constant 0 : index
    %267 = vector.load %arg5[%c0_30, %c0_31, %c0_32, %c0_33] : memref<1x2x2x2xf32, #tpu.memory_space<vmem>>, vector<1x1x2x2xf32>
    %268 = vector.shape_cast %267 : vector<1x1x2x2xf32> to vector<2x2xf32>
    %269 = vector.shape_cast %264 : vector<2x2xf32> to vector<1x1x2x2xf32>
    tpu.vector_store %arg5[%c0_30, %c0_31, %c0_32, %c0_33], %269 {strides = array<i32>} : memref<1x2x2x2xf32, #tpu.memory_space<vmem>>, vector<1x1x2x2xf32>,
    %c0_34 = arith.constant 0 : index
    %c1_35 = arith.constant 1 : index
    %c0_36 = arith.constant 0 : index
    %c0_37 = arith.constant 0 : index
    %270 = vector.load %arg5[%c0_34, %c1_35, %c0_36, %c0_37] : memref<1x2x2x2xf32, #tpu.memory_space<vmem>>, vector<1x1x2x2xf32>
    %271 = vector.shape_cast %270 : vector<1x1x2x2xf32> to vector<2x2xf32>
    %272 = vector.shape_cast %266 : vector<2x2xf32> to vector<1x1x2x2xf32>
    tpu.vector_store %arg5[%c0_34, %c1_35, %c0_36, %c0_37], %272 {strides = array<i32>} : memref<1x2x2x2xf32, #tpu.memory_space<vmem>>, vector<1x1x2x2xf32>,
    return
  }
}

</mosaic_0001>

<llo_original>
// kernel: model_forward.1
$region0: #{model_forward.1}
  #allocation0 [shape = 'u32[]', space=smem, size = 0x4, offset = 0x4, fixed_abs, tag = 'smem constant byte address 0x4 - core index']
  #allocation1 [shape = 'u32[144,128]{1,0:T(1,128)}', space=vmem, size = 0x12000, scoped, tag = 'internal scratch']
  %s0 = inlined_call_operand.vmem [shape: f32[1,1,2,2], index: 0, kind: input, shape index: {}]
  %s1 = inlined_call_operand.vmem [shape: f32[18], index: 1, kind: input, shape index: {}]
  %s2 = inlined_call_operand.vmem [shape: f32[2], index: 2, kind: input, shape index: {}]
  %s3 = inlined_call_operand.vmem [shape: f32[36], index: 3, kind: input, shape index: {}]
  %s4 = inlined_call_operand.vmem [shape: f32[2], index: 4, kind: input, shape index: {}]
  %s5 = inlined_call_operand.hbm [shape: f32[1,2,2,2], index: 5, kind: output, shape index: {}]
  %s6 = sld [smem:[#allocation0]]
  $region46: #{model_forward.1} parent=0
    _
  %s8 = ssub.s32 1, %s6
  %s9 = scalar_select 0, %s8, %s6
  $region1: #{model_forward.1} parent=0
    #allocation2 [shape = 'u8[512]{0}', space=smem, size = 0x200, scoped, tag = 'input window, operand 1, single buffered']
    #allocation3 [shape = 's32[1]{0}', space=sflag, size = 0x4, scoped, tag = 'scoped memory for model_forward.1']
    #allocation4 [shape = 's32[1]{0}', space=sflag, size = 0x4, scoped, tag = 'scoped memory for model_forward.1']
    #allocation5 [shape = 'u8[512]{0}', space=smem, size = 0x200, scoped, tag = 'input window, operand 2, single buffered']
    #allocation6 [shape = 's32[1]{0}', space=sflag, size = 0x4, scoped, tag = 'scoped memory for model_forward.1']
    #allocation7 [shape = 'u8[512]{0}', space=smem, size = 0x200, scoped, tag = 'input window, operand 3, single buffered']
    #allocation8 [shape = 'u8[512]{0}', space=smem, size = 0x200, scoped, tag = 'input window, operand 4, single buffered']
    #allocation9 [shape = 's32[1]{0}', space=sflag, size = 0x4, scoped, tag = 'scoped memory for model_forward.1']
    #allocation10 [shape = 'u8[2048]{0}', space=vmem, size = 0x800, scoped, tag = 'output window, operand 0, single buffered']
    %10 = vsyncpa [#allocation4], 0
    %11 = vsyncpa [#allocation6], 0
    %12 = vsyncpa [#allocation9], 0
    %13 = vsyncpa [#allocation3], 0
    // Predicated region
    $region2: #{model_forward.1} parent=1 // pred_check
      _
    $region3: #{model_forward.1} parent=1 // pred_check_branch
      %15 = sbr.rel (0) target = $region5
    $region4: #{model_forward.1} parent=1 // pred_region
      _
    $region5: #{model_forward.1} parent=1 // pred_fallthru
      _
    // Predicated region
    $region6: #{model_forward.1} parent=1 // pred_check
      _
    $region7: #{model_forward.1} parent=1 // pred_check_branch
      %17 = sbr.rel (0) target = $region9
    $region8: #{model_forward.1} parent=1 // pred_region
      %s19 = ssub.s32 16, 16
      %20 = vsyncadd [#allocation4], %s19
      %s22 = sshll.u32 %s1, 4
      %s23 = int_to_ptr.vmem [resolvable:$true] %s22
      %25 = dma.vmem_to_smem %s23, 16, [#allocation2], [#allocation4]
    $region9: #{model_forward.1} parent=1 // pred_fallthru
      _
    // Predicated region
    $region10: #{model_forward.1} parent=1 // pred_check
      _
    $region11: #{model_forward.1} parent=1 // pred_check_branch
      %27 = sbr.rel (0) target = $region13
    $region12: #{model_forward.1} parent=1 // pred_region
      %s29 = ssub.s32 16, 16
      %30 = vsyncadd [#allocation6], %s29
      %s32 = sshll.u32 %s2, 4
      %s33 = int_to_ptr.vmem [resolvable:$true] %s32
      %35 = dma.vmem_to_smem %s33, 16, [#allocation5], [#allocation6]
    $region13: #{model_forward.1} parent=1 // pred_fallthru
      _
    // Predicated region
    $region14: #{model_forward.1} parent=1 // pred_check
      _
    $region15: #{model_forward.1} parent=1 // pred_check_branch
      %37 = sbr.rel (0) target = $region17
    $region16: #{model_forward.1} parent=1 // pred_region
      %s39 = ssub.s32 16, 16
      %40 = vsyncadd [#allocation6], %s39
      %s42 = sshll.u32 %s3, 4
      %s43 = int_to_ptr.vmem [resolvable:$true] %s42
      %45 = dma.vmem_to_smem %s43, 16, [#allocation7], [#allocation6]
    $region17: #{model_forward.1} parent=1 // pred_fallthru
      _
    // Predicated region
    $region18: #{model_forward.1} parent=1 // pred_check
      _
    $region19: #{model_forward.1} parent=1 // pred_check_branch
      %47 = sbr.rel (0) target = $region21
    $region20: #{model_forward.1} parent=1 // pred_region
      %s49 = ssub.s32 16, 16
      %50 = vsyncadd [#allocation9], %s49
      %s52 = sshll.u32 %s4, 4
      %s53 = int_to_ptr.vmem [resolvable:$true] %s52
      %55 = dma.vmem_to_smem %s53, 16, [#allocation8], [#allocation9]
    $region21: #{model_forward.1} parent=1 // pred_fallthru
      _
    // Predicated region
    $region22: #{model_forward.1} parent=1 // pred_check
      _
    $region23: #{model_forward.1} parent=1 // pred_check_branch
      %57 = sbr.rel (0) target = $region25
    $region24: #{model_forward.1} parent=1 // pred_region
      %58 = dma.done [#allocation4], 16
    $region25: #{model_forward.1} parent=1 // pred_fallthru
      _
    // Predicated region
    $region26: #{model_forward.1} parent=1 // pred_check
      _
    $region27: #{model_forward.1} parent=1 // pred_check_branch
      %60 = sbr.rel (0) target = $region29
    $region28: #{model_forward.1} parent=1 // pred_region
      %61 = dma.done [#allocation6], 16
    $region29: #{model_forward.1} parent=1 // pred_fallthru
      _
    // Predicated region
    $region30: #{model_forward.1} parent=1 // pred_check
      _
    $region31: #{model_forward.1} parent=1 // pred_check_branch
      %63 = sbr.rel (0) target = $region33
    $region32: #{model_forward.1} parent=1 // pred_region
      %64 = dma.done [#allocation6], 16
    $region33: #{model_forward.1} parent=1 // pred_fallthru
      _
    // Predicated region
    $region34: #{model_forward.1} parent=1 // pred_check
      _
    $region35: #{model_forward.1} parent=1 // pred_check_branch
      %66 = sbr.rel (0) target = $region37
    $region36: #{model_forward.1} parent=1 // pred_region
      %67 = dma.done [#allocation9], 16
    $region37: #{model_forward.1} parent=1 // pred_fallthru
      _
    %68 = sfence
    %v69 = vld [vmem:[%s0] sm:$0x3]
    %v71 = vrot.slane %v69, 7
    %vm73 = vcmask 1040384
    %v74 = vsel %vm73, 0.0, %v71
    %vm75 = vcmask 1042432
    %v76 = vsel %vm75, %v74, 0.0
    %78 = vrot.lane.b32.xlu0 %v76, 1
    %v79 = vpop.permute.xlu0 %78
    %vm81 = vcmask 7168
    %v82 = vsel %vm81, 0.0, %v79
    %vm83 = vcmask 23552
    %v84 = vsel %vm83, %v82, 0.0
    %s85 = sld [smem:[#allocation5]]
    %v86 = vstv %s85
    %s87 = sld [smem:[#allocation2]]
    %v88 = vstv %s87
    %v89 = vmul.f32 %v88, %v84
    %v90 = vadd.f32 %v86, %v89
    %s91 = sld [smem:[#allocation2 + $0x1]]
    %v92 = vstv %s91
    %v93 = vmul.f32 %v92, %v84
    %95 = vrot.lane.b32.xlu0 %v93, 127
    %v96 = vpop.permute.xlu0 %95
    %v98 = vadd.f32 %v90, %v96
    %s99 = sld [smem:[#allocation2 + $0x2]]
    %v100 = vstv %s99
    %v101 = vmul.f32 %v100, %v84
    %103 = vrot.lane.b32.xlu0 %v101, 126
    %v104 = vpop.permute.xlu0 %103
    %v106 = vadd.f32 %v98, %v104
    %s107 = sld [smem:[#allocation2 + $0x3]]
    %v108 = vstv %s107
    %v109 = vmul.f32 %v108, %v84
    %v111 = vrot.slane %v109, 1
    %v113 = vadd.f32 %v106, %v111
    %s114 = sld [smem:[#allocation2 + $0x4]]
    %v115 = vstv %s114
    %v116 = vmul.f32 %v115, %v69
    %v117 = vadd.f32 %v113, %v116
    %s118 = sld [smem:[#allocation2 + $0x5]]
    %v119 = vstv %s118
    %v120 = vmul.f32 %v119, %v84
    %v122 = vrot.slane %v120, 1
    %123 = vrot.lane.b32.xlu0 %v122, 126
    %v124 = vpop.permute.xlu0 %123
    %v126 = vadd.f32 %v117, %v124
    %s127 = sld [smem:[#allocation2 + $0x6]]
    %v128 = vstv %s127
    %v129 = vmul.f32 %v128, %v84
    %v131 = vrot.slane %v129, 2
    %v133 = vadd.f32 %v126, %v131
    %s134 = sld [smem:[#allocation2 + $0x7]]
    %v135 = vstv %s134
    %v136 = vmul.f32 %v135, %v84
    %v138 = vrot.slane %v136, 2
    %139 = vrot.lane.b32.xlu0 %v138, 127
    %v140 = vpop.permute.xlu0 %139
    %v142 = vadd.f32 %v133, %v140
    %s143 = sld [smem:[#allocation2 + $0x8]]
    %v144 = vstv %s143
    %v145 = vmul.f32 %v144, %v84
    %v147 = vrot.slane %v145, 2
    %148 = vrot.lane.b32.xlu0 %v147, 126
    %v149 = vpop.permute.xlu0 %148
    %v151 = vadd.f32 %v142, %v149
    %s152 = sld [smem:[#allocation5 + $0x1]]
    %v153 = vstv %s152
    %s154 = sld [smem:[#allocation2 + $0x9]]
    %v155 = vstv %s154
    %v156 = vmul.f32 %v155, %v84
    %v157 = vadd.f32 %v153, %v156
    %s158 = sld [smem:[#allocation2 + $0xa]]
    %v159 = vstv %s158
    %v160 = vmul.f32 %v159, %v84
    %162 = vrot.lane.b32.xlu0 %v160, 127
    %v163 = vpop.permute.xlu0 %162
    %v165 = vadd.f32 %v157, %v163
    %s166 = sld [smem:[#allocation2 + $0xb]]
    %v167 = vstv %s166
    %v168 = vmul.f32 %v167, %v84
    %170 = vrot.lane.b32.xlu0 %v168, 126
    %v171 = vpop.permute.xlu0 %170
    %v173 = vadd.f32 %v165, %v171
    %s174 = sld [smem:[#allocation2 + $0xc]]
    %v175 = vstv %s174
    %v176 = vmul.f32 %v175, %v84
    %v178 = vrot.slane %v176, 1
    %v180 = vadd.f32 %v173, %v178
    %s181 = sld [smem:[#allocation2 + $0xd]]
    %v182 = vstv %s181
    %v183 = vmul.f32 %v182, %v69
    %v184 = vadd.f32 %v180, %v183
    %s185 = sld [smem:[#allocation2 + $0xe]]
    %v186 = vstv %s185
    %v187 = vmul.f32 %v186, %v84
    %v189 = vrot.slane %v187, 1
    %190 = vrot.lane.b32.xlu0 %v189, 126
    %v191 = vpop.permute.xlu0 %190
    %v193 = vadd.f32 %v184, %v191
    %s194 = sld [smem:[#allocation2 + $0xf]]
    %v195 = vstv %s194
    %v196 = vmul.f32 %v195, %v84
    %v198 = vrot.slane %v196, 2
    %v200 = vadd.f32 %v193, %v198
    %s201 = sld [smem:[#allocation2 + $0x10]]
    %v202 = vstv %s201
    %v203 = vmul.f32 %v202, %v84
    %v205 = vrot.slane %v203, 2
    %206 = vrot.lane.b32.xlu0 %v205, 127
    %v207 = vpop.permute.xlu0 %206
    %v209 = vadd.f32 %v200, %v207
    %s210 = sld [smem:[#allocation2 + $0x11]]
    %v211 = vstv %s210
    %v212 = vmul.f32 %v211, %v84
    %v214 = vrot.slane %v212, 2
    %215 = vrot.lane.b32.xlu0 %v214, 126
    %v216 = vpop.permute.xlu0 %215
    %v218 = vadd.f32 %v209, %v216
    %v220 = vrot.slane %v151, 7
    %v222 = vsel %vm73, 0.0, %v220
    %v223 = vsel %vm75, %v222, 0.0
    %225 = vrot.lane.b32.xlu0 %v223, 1
    %v226 = vpop.permute.xlu0 %225
    %v228 = vsel %vm81, 0.0, %v226
    %v229 = vsel %vm83, %v228, 0.0
    %v231 = vrot.slane %v218, 7
    %v233 = vsel %vm73, 0.0, %v231
    %v234 = vsel %vm75, %v233, 0.0
    %236 = vrot.lane.b32.xlu0 %v234, 1
    %v237 = vpop.permute.xlu0 %236
    %v239 = vsel %vm81, 0.0, %v237
    %v240 = vsel %vm83, %v239, 0.0
    %s241 = sld [smem:[#allocation8]]
    %v242 = vstv %s241
    %s243 = sld [smem:[#allocation7 + $0x8]]
    %v244 = vstv %s243
    %v245 = vmul.f32 %v244, %v229
    %v246 = vadd.f32 %v242, %v245
    %s247 = sld [smem:[#allocation7 + $0x7]]
    %v248 = vstv %s247
    %v249 = vmul.f32 %v248, %v229
    %251 = vrot.lane.b32.xlu0 %v249, 127
    %v252 = vpop.permute.xlu0 %251
    %v254 = vadd.f32 %v246, %v252
    %s255 = sld [smem:[#allocation7 + $0x6]]
    %v256 = vstv %s255
    %v257 = vmul.f32 %v256, %v229
    %259 = vrot.lane.b32.xlu0 %v257, 126
    %v260 = vpop.permute.xlu0 %259
    %v262 = vadd.f32 %v254, %v260
    %s263 = sld [smem:[#allocation7 + $0x5]]
    %v264 = vstv %s263
    %v265 = vmul.f32 %v264, %v229
    %v267 = vrot.slane %v265, 1
    %v269 = vadd.f32 %v262, %v267
    %s270 = sld [smem:[#allocation7 + $0x4]]
    %v271 = vstv %s270
    %v272 = vmul.f32 %v271, %v151
    %v273 = vadd.f32 %v269, %v272
    %s274 = sld [smem:[#allocation7 + $0x3]]
    %v275 = vstv %s274
    %v276 = vmul.f32 %v275, %v229
    %v278 = vrot.slane %v276, 1
    %279 = vrot.lane.b32.xlu0 %v278, 126
    %v280 = vpop.permute.xlu0 %279
    %v282 = vadd.f32 %v273, %v280
    %s283 = sld [smem:[#allocation7 + $0x2]]
    %v284 = vstv %s283
    %v285 = vmul.f32 %v284, %v229
    %v287 = vrot.slane %v285, 2
    %v289 = vadd.f32 %v282, %v287
    %s290 = sld [smem:[#allocation7 + $0x1]]
    %v291 = vstv %s290
    %v292 = vmul.f32 %v291, %v229
    %v294 = vrot.slane %v292, 2
    %295 = vrot.lane.b32.xlu0 %v294, 127
    %v296 = vpop.permute.xlu0 %295
    %v298 = vadd.f32 %v289, %v296
    %s299 = sld [smem:[#allocation7]]
    %v300 = vstv %s299
    %v301 = vmul.f32 %v300, %v229
    %v303 = vrot.slane %v301, 2
    %304 = vrot.lane.b32.xlu0 %v303, 126
    %v305 = vpop.permute.xlu0 %304
    %v307 = vadd.f32 %v298, %v305
    %s308 = sld [smem:[#allocation7 + $0x1a]]
    %v309 = vstv %s308
    %v310 = vmul.f32 %v309, %v240
    %v311 = vadd.f32 %v307, %v310
    %s312 = sld [smem:[#allocation7 + $0x19]]
    %v313 = vstv %s312
    %v314 = vmul.f32 %v313, %v240
    %316 = vrot.lane.b32.xlu0 %v314, 127
    %v317 = vpop.permute.xlu0 %316
    %v319 = vadd.f32 %v311, %v317
    %s320 = sld [smem:[#allocation7 + $0x18]]
    %v321 = vstv %s320
    %v322 = vmul.f32 %v321, %v240
    %324 = vrot.lane.b32.xlu0 %v322, 126
    %v325 = vpop.permute.xlu0 %324
    %v327 = vadd.f32 %v319, %v325
    %s328 = sld [smem:[#allocation7 + $0x17]]
    %v329 = vstv %s328
    %v330 = vmul.f32 %v329, %v240
    %v332 = vrot.slane %v330, 1
    %v334 = vadd.f32 %v327, %v332
    %s335 = sld [smem:[#allocation7 + $0x16]]
    %v336 = vstv %s335
    %v337 = vmul.f32 %v336, %v218
    %v338 = vadd.f32 %v334, %v337
    %s339 = sld [smem:[#allocation7 + $0x15]]
    %v340 = vstv %s339
    %v341 = vmul.f32 %v340, %v240
    %v343 = vrot.slane %v341, 1
    %344 = vrot.lane.b32.xlu0 %v343, 126
    %v345 = vpop.permute.xlu0 %344
    %v347 = vadd.f32 %v338, %v345
    %s348 = sld [smem:[#allocation7 + $0x14]]
    %v349 = vstv %s348
    %v350 = vmul.f32 %v349, %v240
    %v352 = vrot.slane %v350, 2
    %v354 = vadd.f32 %v347, %v352
    %s355 = sld [smem:[#allocation7 + $0x13]]
    %v356 = vstv %s355
    %v357 = vmul.f32 %v356, %v240
    %v359 = vrot.slane %v357, 2
    %360 = vrot.lane.b32.xlu0 %v359, 127
    %v361 = vpop.permute.xlu0 %360
    %v363 = vadd.f32 %v354, %v361
    %s364 = sld [smem:[#allocation7 + $0x12]]
    %v365 = vstv %s364
    %v366 = vmul.f32 %v365, %v240
    %v368 = vrot.slane %v366, 2
    %369 = vrot.lane.b32.xlu0 %v368, 126
    %v370 = vpop.permute.xlu0 %369
    %v372 = vadd.f32 %v363, %v370
    %s373 = sld [smem:[#allocation8 + $0x1]]
    %v374 = vstv %s373
    %s375 = sld [smem:[#allocation7 + $0x11]]
    %v376 = vstv %s375
    %v377 = vmul.f32 %v376, %v229
    %v378 = vadd.f32 %v374, %v377
    %s379 = sld [smem:[#allocation7 + $0x10]]
    %v380 = vstv %s379
    %v381 = vmul.f32 %v380, %v229
    %383 = vrot.lane.b32.xlu0 %v381, 127
    %v384 = vpop.permute.xlu0 %383
    %v386 = vadd.f32 %v378, %v384
    %s387 = sld [smem:[#allocation7 + $0xf]]
    %v388 = vstv %s387
    %v389 = vmul.f32 %v388, %v229
    %391 = vrot.lane.b32.xlu0 %v389, 126
    %v392 = vpop.permute.xlu0 %391
    %v394 = vadd.f32 %v386, %v392
    %s395 = sld [smem:[#allocation7 + $0xe]]
    %v396 = vstv %s395
    %v397 = vmul.f32 %v396, %v229
    %v399 = vrot.slane %v397, 1
    %v401 = vadd.f32 %v394, %v399
    %s402 = sld [smem:[#allocation7 + $0xd]]
    %v403 = vstv %s402
    %v404 = vmul.f32 %v403, %v151
    %v405 = vadd.f32 %v401, %v404
    %s406 = sld [smem:[#allocation7 + $0xc]]
    %v407 = vstv %s406
    %v408 = vmul.f32 %v407, %v229
    %v410 = vrot.slane %v408, 1
    %411 = vrot.lane.b32.xlu0 %v410, 126
    %v412 = vpop.permute.xlu0 %411
    %v414 = vadd.f32 %v405, %v412
    %s415 = sld [smem:[#allocation7 + $0xb]]
    %v416 = vstv %s415
    %v417 = vmul.f32 %v416, %v229
    %v419 = vrot.slane %v417, 2
    %v421 = vadd.f32 %v414, %v419
    %s422 = sld [smem:[#allocation7 + $0xa]]
    %v423 = vstv %s422
    %v424 = vmul.f32 %v423, %v229
    %v426 = vrot.slane %v424, 2
    %427 = vrot.lane.b32.xlu0 %v426, 127
    %v428 = vpop.permute.xlu0 %427
    %v430 = vadd.f32 %v421, %v428
    %s431 = sld [smem:[#allocation7 + $0x9]]
    %v432 = vstv %s431
    %v433 = vmul.f32 %v432, %v229
    %v435 = vrot.slane %v433, 2
    %436 = vrot.lane.b32.xlu0 %v435, 126
    %v437 = vpop.permute.xlu0 %436
    %v439 = vadd.f32 %v430, %v437
    %s440 = sld [smem:[#allocation7 + $0x23]]
    %v441 = vstv %s440
    %v442 = vmul.f32 %v441, %v240
    %v443 = vadd.f32 %v439, %v442
    %s444 = sld [smem:[#allocation7 + $0x22]]
    %v445 = vstv %s444
    %v446 = vmul.f32 %v445, %v240
    %448 = vrot.lane.b32.xlu0 %v446, 127
    %v449 = vpop.permute.xlu0 %448
    %v451 = vadd.f32 %v443, %v449
    %s452 = sld [smem:[#allocation7 + $0x21]]
    %v453 = vstv %s452
    %v454 = vmul.f32 %v453, %v240
    %456 = vrot.lane.b32.xlu0 %v454, 126
    %v457 = vpop.permute.xlu0 %456
    %v459 = vadd.f32 %v451, %v457
    %s460 = sld [smem:[#allocation7 + $0x20]]
    %v461 = vstv %s460
    %v462 = vmul.f32 %v461, %v240
    %v464 = vrot.slane %v462, 1
    %v466 = vadd.f32 %v459, %v464
    %s467 = sld [smem:[#allocation7 + $0x1f]]
    %v468 = vstv %s467
    %v469 = vmul.f32 %v468, %v218
    %v470 = vadd.f32 %v466, %v469
    %s471 = sld [smem:[#allocation7 + $0x1e]]
    %v472 = vstv %s471
    %v473 = vmul.f32 %v472, %v240
    %v475 = vrot.slane %v473, 1
    %476 = vrot.lane.b32.xlu0 %v475, 126
    %v477 = vpop.permute.xlu0 %476
    %v479 = vadd.f32 %v470, %v477
    %s480 = sld [smem:[#allocation7 + $0x1d]]
    %v481 = vstv %s480
    %v482 = vmul.f32 %v481, %v240
    %v484 = vrot.slane %v482, 2
    %v486 = vadd.f32 %v479, %v484
    %s487 = sld [smem:[#allocation7 + $0x1c]]
    %v488 = vstv %s487
    %v489 = vmul.f32 %v488, %v240
    %v491 = vrot.slane %v489, 2
    %492 = vrot.lane.b32.xlu0 %v491, 127
    %v493 = vpop.permute.xlu0 %492
    %v495 = vadd.f32 %v486, %v493
    %s496 = sld [smem:[#allocation7 + $0x1b]]
    %v497 = vstv %s496
    %v498 = vmul.f32 %v497, %v240
    %v500 = vrot.slane %v498, 2
    %501 = vrot.lane.b32.xlu0 %v500, 126
    %v502 = vpop.permute.xlu0 %501
    %v504 = vadd.f32 %v495, %v502
    %v505 = vsub.f32 %v372, %v504
    %v506 = vsub.f32 0.0, %v505
    %v507 = vmul.f32 %v506, 1.442695
    %v508 = vpow.pop %v507
    %v509 = vadd.f32 %v508, 1.0
    %v510 = vrcp.pop %v509
    %v511 = vsub.f32 1.0, %v510
    %vm512 = vcmask 9216
    %513 = vst.msk [vmem:[#allocation10] sm:$0x3] %vm512, %v510
    %s514 = scalar_lea.vmem [#allocation10], 2
    %515 = vst.msk [vmem:[%s514] sm:$0x3] %vm512, %v511
    // Predicated region
    $region38: #{model_forward.1} parent=1 // pred_check
      _
    $region39: #{model_forward.1} parent=1 // pred_check_branch
      %517 = sbr.rel (0) target = $region41
    $region40: #{model_forward.1} parent=1 // pred_region
      %s519 = ssub.s32 64, 64
      %520 = vsyncadd [#allocation3], %s519
      %s521 = sshll.u32 [#allocation10], 4
      %s522 = int_to_ptr.vmem [resolvable:$true] %s521
      %527 = dma.vmem_to_hbm [thread:$0]  %s522, 64, %s5, [#allocation3], 32, 32, 2
    $region41: #{model_forward.1} parent=1 // pred_fallthru
      _
    // Predicated region
    $region42: #{model_forward.1} parent=1 // pred_check
      _
    $region43: #{model_forward.1} parent=1 // pred_check_branch
      %529 = sbr.rel (0) target = $region45
    $region44: #{model_forward.1} parent=1 // pred_region
      %530 = dma.done [#allocation3], 64
    $region45: #{model_forward.1} parent=1 // pred_fallthru
      _
    %531 = vsyncpa [#allocation3], 1
    %532 = vsyncpa [#allocation4], 1
    %533 = vsyncpa [#allocation6], 1
    %534 = vsyncpa [#allocation9], 1

</llo_original>
